<compile_context>
chip_gen: v6e
topology: v6e:2x2x1
jax: 0.10.0
libtpu: 0.0.40
codegen_flags: <defaults>
</compile_context>

<pallas_src>
import functools

import jax
import jax.numpy as jnp
from jax.experimental import pallas as pl
from jax.experimental.pallas import tpu as pltpu


def _guidance_kernel(x_ref, w_ref, b_ref, o_ref):
    # x_ref: (NB, C_in, TP)   pixels on lanes, channels on sublanes
    # w_ref: (C_out, C_in)    full weight (resident in VMEM)
    # b_ref: (C_out, 1)       bias
    # o_ref: (NB, C_out, TP)  lane-dense output block
    w = w_ref[...]
    b = b_ref[...]
    nb = x_ref.shape[0]
    for i in range(nb):  # static, small unroll (nb <= 128)
        acc = jnp.dot(w, x_ref[i], preferred_element_type=jnp.float32)
        acc = acc + b
        # sigmoid(x) == 0.5 * tanh(0.5 * x) + 0.5  -> single EUP op per element
        o_ref[i] = (0.5 * jnp.tanh(0.5 * acc) + 0.5).astype(o_ref.dtype)


def _cdiv(a, b):
    return -(-a // b)


def _largest_divisor_leq(n, k):
    k = max(1, min(k, n))
    for d in range(k, 0, -1):
        if n % d == 0:
            return d
    return 1


# ~11.25 MiB of per-step VMEM at ~160 padded f32 bytes / pixel:
#   2x double-buffered x (c_in padded 4->8 sublanes) + 2x out (c_out=8)
#   + 1x f32 dot/sigmoid intermediate  ≈ 5 * 8 * 4 B = 160 B per pixel.
_PIXEL_BUDGET = 72 * 1024      # pixels per grid step (VMEM-safe on v5e default)
_TARGET_PIXELS = 64 * 1024     # ~3 MB useful HBM bytes per step at 48 B/pixel
_MAX_BATCH_BLOCK = 128         # bound the static unroll inside the kernel


def _choose_tiling(n, hw, tp_max):
    """Pick (batch_block, pixel_tile) so each grid step moves multi-MB of HBM
    traffic, VMEM stays under the v5e default scoped limit, and (when the
    problem allows) there are >=2 grid steps for v7x's two TensorCores."""
    tp = tp_max if hw > tp_max else hw       # full extent or multiple of 128
    nb = 1
    if _cdiv(hw, tp) == 1:                   # whole image fits one pixel tile
        if n == 1:
            # Split the pixel axis in two (lane tile must stay a multiple of
            # 128) so both v7x TensorCores get work.
            half = _cdiv(_cdiv(hw, 2), 128) * 128
            if half < hw:
                tp = half
        else:
            # Batch-block: enough pixels per step to amortize step overhead,
            # but always >= 2 total steps and within the VMEM pixel budget.
            steps_wanted = max(2, _cdiv(n * hw, _TARGET_PIXELS))
            nb_desired = _cdiv(n, steps_wanted)
            nb_desired = min(nb_desired,
                             max(1, _PIXEL_BUDGET // max(hw, 1)),
                             _MAX_BATCH_BLOCK,
                             n)
            nb = _largest_divisor_leq(n, nb_desired)
    return nb, tp


@functools.partial(jax.jit, static_argnames=("tp_max",))
def guidance_map(x_nchw, weight, bias, *, tp_max=65536):
    """Pointwise 1x1 conv + sigmoid (HDRNet guidance map).

    x_nchw : (N, C_in, H, W) float32
    weight : PyTorch Conv2d weight (C_out, C_in, 1, 1) or (C_out, C_in) float32
    bias   : (C_out,) float32
    returns: (N, C_out, H, W) float32
    """
    n, c_in, h, w = x_nchw.shape
    if weight.ndim == 4:  # PyTorch Conv2d(kernel_size=1) weight layout
        weight = weight.reshape(weight.shape[0], weight.shape[1])
    c_out = weight.shape[0]
    assert weight.shape[1] == c_in, "weight must be (C_out, C_in[,1,1])"
    assert tp_max % 128 == 0, "pixel tile cap must be a multiple of 128 lanes"

    hw = h * w
    # Free reshapes: stay in NCHW; no transposes anywhere in the wrapper.
    x3 = x_nchw.reshape(n, c_in, hw)
    b2d = bias.reshape(c_out, 1)

    nb, tp = _choose_tiling(n, hw, tp_max)
    grid = (n // nb, _cdiv(hw, tp))

    cost = pl.CostEstimate(
        flops=2 * n * hw * c_in * c_out,
        transcendentals=n * hw * c_out,  # one tanh per output element
        bytes_accessed=4 * (n * hw * (c_in + c_out) + c_in * c_out + c_out),
    )

    out3 = pl.pallas_call(
        _guidance_kernel,
        out_shape=jax.ShapeDtypeStruct((n, c_out, hw), x_nchw.dtype),
        grid_spec=pltpu.PrefetchScalarGridSpec(
            num_scalar_prefetch=0,
            grid=grid,
            in_specs=[
                pl.BlockSpec((nb, c_in, tp), lambda b, p: (b, 0, p)),
                pl.BlockSpec((c_out, c_in), lambda b, p: (0, 0)),
                pl.BlockSpec((c_out, 1), lambda b, p: (0, 0)),
            ],
            out_specs=pl.BlockSpec((nb, c_out, tp), lambda b, p: (b, 0, p)),
        ),
        compiler_params=pltpu.CompilerParams(
            dimension_semantics=("parallel", "parallel"),
        ),
        cost_estimate=cost,
    )(x3, weight, b2d)

    return out3.reshape(n, c_out, h, w)


if __name__ == "__main__":
    # Small, PyTorch-consistent shapes: N=2, C_in=4, H=W=16, C_out=8.
    N, C_IN, H, W = 2, 4, 16, 16
    C_OUT = 8

    key = jax.random.PRNGKey(0)
    kx, kw, kb = jax.random.split(key, 3)

    x = jax.random.normal(kx, (N, C_IN, H, W), dtype=jnp.float32)
    # Deterministic synthetic parameters (Conv2d(C_IN, C_OUT, 1) equivalent),
    # kept in PyTorch's native (C_out, C_in, 1, 1) layout.
    fan_in = C_IN  # kernel_size = 1x1
    bound = 1.0 / (fan_in ** 0.5)
    weight = jax.random.uniform(kw, (C_OUT, C_IN, 1, 1), minval=-bound,
                                maxval=bound, dtype=jnp.float32)
    bias = jax.random.uniform(kb, (C_OUT,), minval=-bound, maxval=bound,
                              dtype=jnp.float32)

    w2d = weight.reshape(C_OUT, C_IN)

    def ref_fn(xx):
        return jax.nn.sigmoid(
            jnp.einsum("nchw,oc->nohw", xx, w2d) + bias[None, :, None, None])

    # Base case.
    out = jax.block_until_ready(guidance_map(x, weight, bias))
    assert out.shape == (N, C_OUT, H, W)
    assert jnp.allclose(out, ref_fn(x), atol=1e-5, rtol=1e-5)

    # Batch-blocked path (nb > 1): larger batch, small spatial.
    x8 = jax.random.normal(kx, (8, C_IN, 16, 16), dtype=jnp.float32)
    out8 = jax.block_until_ready(guidance_map(x8, weight, bias))
    assert jnp.allclose(out8, ref_fn(x8), atol=1e-5, rtol=1e-5)

    # Pixel-split path (N == 1, image fits one tile): >=2 grid steps with a
    # masked ragged tail (63*63 = 3969 pixels, tile 2048).
    x1 = jax.random.normal(kx, (1, C_IN, 63, 63), dtype=jnp.float32)
    out1 = jax.block_until_ready(guidance_map(x1, weight, bias))
    assert jnp.allclose(out1, ref_fn(x1), atol=1e-5, rtol=1e-5)

    # Spatial size not a multiple of 128 (full-extent lane tile).
    x2 = jax.random.normal(kx, (N, C_IN, 15, 15), dtype=jnp.float32)
    out2 = jax.block_until_ready(guidance_map(x2, weight, bias))
    assert jnp.allclose(out2, ref_fn(x2), atol=1e-5, rtol=1e-5)

    print("KERNEL_OK")
</pallas_src>

<mosaic_0001>
module attributes {stable_mosaic.version = 11 : i64} {
  func.func @_guidance_kernel(%arg0: i32, %arg1: i32, %arg2: memref<1x4x256xf32, #tpu.memory_space<vmem>>, %arg3: memref<8x4xf32, #tpu.memory_space<vmem>>, %arg4: memref<8x1xf32, #tpu.memory_space<vmem>>, %arg5: memref<1x8x256xf32, #tpu.memory_space<vmem>>) attributes {dimension_semantics = [#tpu.dimension_semantics<parallel>, #tpu.dimension_semantics<parallel>], iteration_bounds = array<i64: 2, 1>, scalar_prefetch = 0 : i64, scratch_operands = 0 : i64, tpu.core_type = #tpu.core_type<tc>, window_params = [{transform_indices = @transform_0, window_bounds = array<i64: 1, 4, 256>}, {pipeline_mode = #tpu.pipeline_mode<synchronous>, transform_indices = @transform_1, window_bounds = array<i64: 8, 4>}, {pipeline_mode = #tpu.pipeline_mode<synchronous>, transform_indices = @transform_2, window_bounds = array<i64: 8, 1>}, {transform_indices = @transform_3, window_bounds = array<i64: 1, 8, 256>}]} {
    %c0 = arith.constant 0 : index
    %c0_0 = arith.constant 0 : index
    %0 = vector.load %arg3[%c0, %c0_0] : memref<8x4xf32, #tpu.memory_space<vmem>>, vector<8x4xf32>
    %c0_1 = arith.constant 0 : index
    %c0_2 = arith.constant 0 : index
    %1 = vector.load %arg4[%c0_1, %c0_2] : memref<8x1xf32, #tpu.memory_space<vmem>>, vector<8x1xf32>
    %c0_3 = arith.constant 0 : index
    %c0_4 = arith.constant 0 : index
    %c0_5 = arith.constant 0 : index
    %2 = vector.load %arg2[%c0_3, %c0_4, %c0_5] : memref<1x4x256xf32, #tpu.memory_space<vmem>>, vector<1x4x256xf32>
    %3 = vector.shape_cast %2 : vector<1x4x256xf32> to vector<4x256xf32>
    %cst = arith.constant dense<0.000000e+00> : vector<8x256xf32>
    %4 = tpu.matmul %0, %3, %cst {dimension_numbers = #tpu.dot_dimension_numbers<[1], [0], [0], [1], [0, 0, 1, 1], [], []>} : vector<8x4xf32>, vector<4x256xf32>, vector<8x256xf32> -> vector<8x256xf32>
    %5 = vector.broadcast %1 : vector<8x1xf32> to vector<8x256xf32>
    %6 = arith.addf %4, %5 : vector<8x256xf32>
    %cst_6 = arith.constant 5.000000e-01 : f32
    %7 = vector.broadcast %cst_6 : f32 to vector<8x256xf32>
    %8 = arith.mulf %7, %6 : vector<8x256xf32>
    %9 = math.tanh %8 : vector<8x256xf32>
    %cst_7 = arith.constant 5.000000e-01 : f32
    %10 = vector.broadcast %cst_7 : f32 to vector<8x256xf32>
    %11 = arith.mulf %10, %9 : vector<8x256xf32>
    %cst_8 = arith.constant 5.000000e-01 : f32
    %12 = vector.broadcast %cst_8 : f32 to vector<8x256xf32>
    %13 = arith.addf %11, %12 : vector<8x256xf32>
    %c0_9 = arith.constant 0 : index
    %c0_10 = arith.constant 0 : index
    %c0_11 = arith.constant 0 : index
    %14 = vector.load %arg5[%c0_9, %c0_10, %c0_11] : memref<1x8x256xf32, #tpu.memory_space<vmem>>, vector<1x8x256xf32>
    %15 = vector.shape_cast %14 : vector<1x8x256xf32> to vector<8x256xf32>
    %16 = vector.shape_cast %13 : vector<8x256xf32> to vector<1x8x256xf32>
    tpu.vector_store %arg5[%c0_9, %c0_10, %c0_11], %16 {strides = array<i32>} : memref<1x8x256xf32, #tpu.memory_space<vmem>>, vector<1x8x256xf32>,
    return
  }
  func.func @transform_0(%arg0: i32, %arg1: i32) -> (i32, i32, i32) {
    %c0_i32 = arith.constant 0 : i32
    %c0_i32_0 = arith.constant 0 : i32
    return %arg0, %c0_i32, %arg1 : i32, i32, i32
  }
  func.func @transform_1(%arg0: i32, %arg1: i32) -> (i32, i32) {
    %c0_i32 = arith.constant 0 : i32
    %c0_i32_0 = arith.constant 0 : i32
    %c0_i32_1 = arith.constant 0 : i32
    return %c0_i32, %c0_i32_0 : i32, i32
  }
  func.func @transform_2(%arg0: i32, %arg1: i32) -> (i32, i32) {
    %c0_i32 = arith.constant 0 : i32
    %c0_i32_0 = arith.constant 0 : i32
    %c0_i32_1 = arith.constant 0 : i32
    return %c0_i32, %c0_i32_0 : i32, i32
  }
  func.func @transform_3(%arg0: i32, %arg1: i32) -> (i32, i32, i32) {
    %c0_i32 = arith.constant 0 : i32
    %c0_i32_0 = arith.constant 0 : i32
    return %arg0, %c0_i32, %arg1 : i32, i32, i32
  }
}

</mosaic_0001>

<llo_original>
// kernel: guidance_map.1
$region0: #{guidance_map.1}
  #allocation0 [shape = 'u32[]', space=smem, size = 0x4, offset = 0x4, fixed_abs, tag = 'smem constant byte address 0x4 - core index']
  #allocation1 [shape = 'u32[144,128]{1,0:T(1,128)}', space=vmem, size = 0x12000, scoped, tag = 'internal scratch']
  %s0 = inlined_call_operand.vmem [shape: f32[2,4,256], index: 0, kind: input, shape index: {}]
  %s1 = inlined_call_operand.vmem [shape: f32[8,4], index: 1, kind: input, shape index: {}]
  %s2 = inlined_call_operand.vmem [shape: f32[8,1], index: 2, kind: input, shape index: {}]
  %s3 = inlined_call_operand.vmem [shape: f32[2,8,256], index: 3, kind: output, shape index: {}]
  %s4 = sld [smem:[#allocation0]]
  $region45: #{guidance_map.1} parent=0
    _
  %s6 = ssub.s32 1, %s4
  %s7 = scalar_select 0, %s6, %s4
  loop: start=0, step=1, limit=4
  $region2: #{guidance_map.1} parent=0 // loop_pre_header
    _
  $region3: #{guidance_map.1} parent=0 // loop_header
    %s9 = sphi 0, %s13
    %p10 = scmp.ge.s32.totalorder %s9, 4
    %s16 = sphi 0, %s28
    %s17 = sphi 0, %s24
    %s18 = sphi 0, %s16
    %s19 = sphi 0, %s17
    %s20 = sphi 0, %s18
    %s21 = sphi 0, %s19
    %s33 = sphi 0, %s35
    %s36 = sphi 0, %s33
    %s37 = sphi 0, %s36
    %s53 = sphi 0, %s37
    %s57 = sphi 0, %s57
    %s59 = sphi 0, %s57
    %s60 = sphi 0, %s59
    %s74 = sphi 0, %s60
    %s78 = sphi 0, %s78
    %s80 = sphi 0, %s78
    %s81 = sphi 0, %s80
    %s95 = sphi 0, %s81
    %s103 = sphi 0, %s105
    %s106 = sphi 0, %s103
    %s107 = sphi 0, %s106
    %s123 = sphi 0, %s107
  $region4: #{guidance_map.1} parent=0 // loop_header_branch
    %12 = sbr.rel (%p10) target = $region8
  $region5: #{guidance_map.1} parent=0 // loop_body
    %s14 = ssub.s32 %s9, 1
    %s15 = ssub.s32 %s9, 2
    %s22 = sadd.s32 1, %s17
    %p23 = scmp.ge.s32.totalorder %s22, 1
    %s24 = scalar_select %p23, 0, %s22
    %s25 = sadd.s32 1, %s16
    %s26 = scalar_select %p23, %s25, %s16
    %p27 = scmp.ge.s32.totalorder %s26, 2
    %s28 = scalar_select %p27, 0, %s26
    %s29 = ssub.s32 %s16, %s28
    %s30 = ssub.s32 %s17, %s24
    %s31 = sor.u32 %s29, %s30
    %p32 = scmp.eq.s32.totalorder %s31, 0
    %s34 = sadd.s32 %s33, 1
    %s35 = scalar_select %p32, %s33, %s34
    %p38 = pneg %p32
    %p39 = scmp.eq.s32.totalorder %s9, 1
    %p40 = por %p38, %p39
    %p41 = scmp.ne.s32.totalorder %s33, %s36
    %p42 = scmp.eq.s32.totalorder %s9, 0
    %p43 = por %p41, %p42
    %p44 = scmp.ne.s32.totalorder %s33, %s36
    %p45 = scmp.eq.s32.totalorder %s14, 1
    %p46 = por %p44, %p45
    %p47 = scmp.ne.s32.totalorder %s36, %s37
    %p48 = scmp.eq.s32.totalorder %s14, 0
    %p49 = por %p47, %p48
    %p50 = scmp.ne.s32.totalorder %s36, %s37
    %p51 = scmp.eq.s32.totalorder %s15, 1
    %p52 = por %p50, %p51
    %p54 = scmp.ne.s32.totalorder %s37, %s53
    %p55 = scmp.eq.s32.totalorder %s15, 0
    %p56 = por %p54, %p55
    %s58 = sadd.s32 %s57, 1
    %p61 = scmp.eq.s32.totalorder %s9, 1
    %p62 = scmp.ne.s32.totalorder %s57, %s59
    %p63 = scmp.eq.s32.totalorder %s9, 0
    %p64 = por %p62, %p63
    %p65 = scmp.ne.s32.totalorder %s57, %s59
    %p66 = scmp.eq.s32.totalorder %s14, 1
    %p67 = por %p65, %p66
    %p68 = scmp.ne.s32.totalorder %s59, %s60
    %p69 = scmp.eq.s32.totalorder %s14, 0
    %p70 = por %p68, %p69
    %p71 = scmp.ne.s32.totalorder %s59, %s60
    %p72 = scmp.eq.s32.totalorder %s15, 1
    %p73 = por %p71, %p72
    %p75 = scmp.ne.s32.totalorder %s60, %s74
    %p76 = scmp.eq.s32.totalorder %s15, 0
    %p77 = por %p75, %p76
    %s79 = sadd.s32 %s78, 1
    %p82 = scmp.eq.s32.totalorder %s9, 1
    %p83 = scmp.ne.s32.totalorder %s78, %s80
    %p84 = scmp.eq.s32.totalorder %s9, 0
    %p85 = por %p83, %p84
    %p86 = scmp.ne.s32.totalorder %s78, %s80
    %p87 = scmp.eq.s32.totalorder %s14, 1
    %p88 = por %p86, %p87
    %p89 = scmp.ne.s32.totalorder %s80, %s81
    %p90 = scmp.eq.s32.totalorder %s14, 0
    %p91 = por %p89, %p90
    %p92 = scmp.ne.s32.totalorder %s80, %s81
    %p93 = scmp.eq.s32.totalorder %s15, 1
    %p94 = por %p92, %p93
    %p96 = scmp.ne.s32.totalorder %s81, %s95
    %p97 = scmp.eq.s32.totalorder %s15, 0
    %p98 = por %p96, %p97
    %s99 = ssub.s32 %s16, %s28
    %s100 = ssub.s32 %s17, %s24
    %s101 = sor.u32 %s99, %s100
    %p102 = scmp.eq.s32.totalorder %s101, 0
    %s104 = sadd.s32 %s103, 1
    %s105 = scalar_select %p102, %s103, %s104
    %p108 = pneg %p102
    %p109 = scmp.eq.s32.totalorder %s9, 1
    %p110 = por %p108, %p109
    %p111 = scmp.ne.s32.totalorder %s103, %s106
    %p112 = scmp.eq.s32.totalorder %s9, 0
    %p113 = por %p111, %p112
    %p114 = scmp.ne.s32.totalorder %s103, %s106
    %p115 = scmp.eq.s32.totalorder %s14, 1
    %p116 = por %p114, %p115
    %p117 = scmp.ne.s32.totalorder %s106, %s107
    %p118 = scmp.eq.s32.totalorder %s14, 0
    %p119 = por %p117, %p118
    %p120 = scmp.ne.s32.totalorder %s106, %s107
    %p121 = scmp.eq.s32.totalorder %s15, 1
    %p122 = por %p120, %p121
    %p124 = scmp.ne.s32.totalorder %s107, %s123
    %p125 = scmp.eq.s32.totalorder %s15, 0
    %p126 = por %p124, %p125
    %p127 = scmp.le.s32.totalorder 1, %s9
    %p128 = scmp.lt.s32.totalorder %s9, 3
    %p129 = pnand %p127, %p128
    %p130 = pneg %p129
    // Predicated region
    $region9: #{guidance_map.1} parent=5 // pred_check
      _
    $region10: #{guidance_map.1} parent=5 // pred_check_branch
      %132 = sbr.rel (%p129) target = $region12
    $region11: #{guidance_map.1} parent=5 // pred_region
      %s133 = ssub.s32 %s9, 1
      // Predicated region
      $region13: #{guidance_map.1} parent=11 // pred_check
        %p134 = pneg %p70
      $region14: #{guidance_map.1} parent=11 // pred_check_branch
        %136 = sbr.rel (%p134) target = $region16
      $region15: #{guidance_map.1} parent=11 // pred_region
        _
      $region16: #{guidance_map.1} parent=11 // pred_fallthru
        _
      // Predicated region
      $region17: #{guidance_map.1} parent=11 // pred_check
        %p137 = pneg %p91
      $region18: #{guidance_map.1} parent=11 // pred_check_branch
        %139 = sbr.rel (%p137) target = $region20
      $region19: #{guidance_map.1} parent=11 // pred_region
        _
      $region20: #{guidance_map.1} parent=11 // pred_fallthru
        _
    $region12: #{guidance_map.1} parent=5 // pred_fallthru
      _
    %p140 = scmp.lt.s32.totalorder %s9, 2
    // Predicated region
    $region21: #{guidance_map.1} parent=5 // pred_check
      %p141 = pneg %p140
    $region22: #{guidance_map.1} parent=5 // pred_check_branch
      %143 = sbr.rel (%p141) target = $region24
    $region23: #{guidance_map.1} parent=5 // pred_region
      // Predicated region
      $region25: #{guidance_map.1} parent=23 // pred_check
        %p144 = pneg %p43
      $region26: #{guidance_map.1} parent=23 // pred_check_branch
        %146 = sbr.rel (%p144) target = $region28
      $region27: #{guidance_map.1} parent=23 // pred_region
        %s147 = smul.u32 2, %s17
        %p148 = scmp.lt.s32.totalorder %s16, 1
        %s149 = scalar_select %p148, %s16, 1
        %p150 = scmp.lt.s32.totalorder %s147, 1
        %s151 = scalar_select %p150, %s147, 1
        %s152 = smul.addr %s149, 2
        %s153 = sadd.s32 %s151, %s152
        %s154 = smul.addr %s153, 4
        %s155 = scalar_lea.vmem %s0, %s154
        %s156 = smul.u32 2, %s17
      $region28: #{guidance_map.1} parent=23 // pred_fallthru
        _
    $region24: #{guidance_map.1} parent=5 // pred_fallthru
      _
    %p157 = scmp.le.s32.totalorder 1, %s9
    %p158 = scmp.lt.s32.totalorder %s9, 3
    %p159 = pnand %p157, %p158
    %p160 = pneg %p159
    // Predicated region
    $region29: #{guidance_map.1} parent=5 // pred_check
      _
    $region30: #{guidance_map.1} parent=5 // pred_check_branch
      %162 = sbr.rel (%p159) target = $region32
    $region31: #{guidance_map.1} parent=5 // pred_region
      %s163 = ssub.s32 %s9, 1
      %s164 = smul.u32 2, %s19
      %p165 = scmp.lt.s32.totalorder %s18, 1
      %s166 = scalar_select %p165, %s18, 1
      %p167 = scmp.lt.s32.totalorder %s164, 1
      %s168 = scalar_select %p167, %s164, 1
      %s169 = smul.addr %s166, 2
      %s170 = sadd.s32 %s168, %s169
      %s171 = smul.addr %s170, 4
      %s172 = scalar_lea.vmem %s0, %s171
      %p173 = pneg %p49
      %p174 = pneg %p46
      %p175 = pneg %p70
      %p176 = pneg %p67
      %p177 = pneg %p91
      %p178 = pneg %p88
      %p179 = pneg %p119
      %p180 = pneg %p116
      %s181 = smul.u32 2, %s19
      %p182 = scmp.lt.s32.totalorder %s18, 1
      %s183 = scalar_select %p182, %s18, 1
      %p184 = scmp.lt.s32.totalorder %s181, 1
      %s185 = scalar_select %p184, %s181, 1
      %s186 = smul.addr %s183, 2
      %s187 = sadd.s32 %s185, %s186
      %s188 = smul.addr %s187, 8
      %s189 = scalar_lea.vmem %s3, %s188
      %s190 = smul.u32 2, %s19
      %p191 = scmp.lt.s32.totalorder %s18, 1
      %s192 = scalar_select %p191, %s18, 1
      %p193 = scmp.lt.s32.totalorder %s190, 1
      %s194 = scalar_select %p193, %s190, 1
      %s195 = smul.addr %s192, 2
      %s196 = sadd.s32 %s194, %s195
      %s197 = smul.addr %s196, 4
      %s198 = scalar_lea.vmem %s0, %s197
      %s199 = smul.u32 2, %s19
      %s200 = smul.u32 2, %s19
      %p201 = scmp.lt.s32.totalorder %s18, 1
      %s202 = scalar_select %p201, %s18, 1
      %p203 = scmp.lt.s32.totalorder %s200, 1
      %s204 = scalar_select %p203, %s200, 1
      %s205 = smul.addr %s202, 2
      %s206 = sadd.s32 %s204, %s205
      %s207 = smul.addr %s206, 8
      %s208 = scalar_lea.vmem %s3, %s207
      %s209 = smul.u32 2, %s19
      %v210 = vld [vmem:[%s1] sm:$0xff]
      %v211 = vld [vmem:[%s2] sm:$0xff]
      %v212 = vld [vmem:[%s198] sm:$0xff]
      %214 = vset.pattern.permute.xlu0 0
      %215 = vperm.xlu0 %214, %v211
      %v216 = vpop.permute.xlu0 %215
      %v219 = vcombine.high %v212, %v212
      %vm220 = vcmask 31744
      %v222 = vsel %vm220, %v210, 0
      %vm224 = vcmask 1043456
      %v225 = vsel %vm224, %v212, 0
      %v227 = vsel %vm224, %v219, 0
      %229 = vmatprep.subr.mxu0 0.0
      %230 = vmatpush1.msra.mxu0 0.0
      %231 = vmatprep.subr.mxu0 0.0
      %232 = vmatpush1.msra.mxu0 0.0
      %233 = vmatprep.subr.mxu0 0.0
      %234 = vmatpush1.msra.mxu0 0.0
      %235 = vmatprep.subr.mxu0 0.0
      %236 = vmatpush1.msra.mxu0 0.0
      %237 = vmatprep.subr.mxu0 0.0
      %238 = vmatpush1.msra.mxu0 0.0
      %239 = vmatprep.subr.mxu0 0.0
      %240 = vmatpush1.msra.mxu0 0.0
      %241 = vmatprep.subr.mxu0 0.0
      %242 = vmatpush1.msra.mxu0 0.0
      %243 = vmatprep.subr.mxu0 0.0
      %244 = vmatpush1.msra.mxu0 0.0
      %245 = vmatprep.subr.mxu0 0.0
      %246 = vmatpush1.msra.mxu0 0.0
      %247 = vmatprep.subr.mxu0 0.0
      %248 = vmatpush1.msra.mxu0 0.0
      %249 = vmatprep.subr.mxu0 0.0
      %250 = vmatpush1.msra.mxu0 0.0
      %251 = vmatprep.subr.mxu0 0.0
      %252 = vmatpush1.msra.mxu0 0.0
      %253 = vmatprep.subr.mxu0 0.0
      %254 = vmatpush1.msra.mxu0 0.0
      %255 = vmatprep.subr.mxu0 0.0
      %256 = vmatpush1.msra.mxu0 0.0
      %257 = vmatprep.subr.mxu0 0.0
      %258 = vmatpush1.msra.mxu0 0.0
      %259 = vmatprep.subr.mxu0 %v227
      %260 = vmatpush1.msra.mxu0 %v225
      %261 = vmatprep.subr.mxu0 0.0
      %262 = vmatpush2.msra.mxu0 0.0
      %263 = vmatprep.subr.mxu0 0.0
      %264 = vmatpush2.msra.mxu0 0.0
      %265 = vmatprep.subr.mxu0 0.0
      %266 = vmatpush2.msra.mxu0 0.0
      %267 = vmatprep.subr.mxu0 0.0
      %268 = vmatpush2.msra.mxu0 0.0
      %269 = vmatprep.subr.mxu0 0.0
      %270 = vmatpush2.msra.mxu0 0.0
      %271 = vmatprep.subr.mxu0 0.0
      %272 = vmatpush2.msra.mxu0 0.0
      %273 = vmatprep.subr.mxu0 0.0
      %274 = vmatpush2.msra.mxu0 0.0
      %275 = vmatprep.subr.mxu0 0.0
      %276 = vmatpush2.msra.mxu0 0.0
      %277 = vmatprep.subr.mxu0 0.0
      %278 = vmatpush2.msra.mxu0 0.0
      %279 = vmatprep.subr.mxu0 0.0
      %280 = vmatpush2.msra.mxu0 0.0
      %281 = vmatprep.subr.mxu0 0.0
      %282 = vmatpush2.msra.mxu0 0.0
      %283 = vmatprep.subr.mxu0 0.0
      %284 = vmatpush2.msra.mxu0 0.0
      %285 = vmatprep.subr.mxu0 0.0
      %286 = vmatpush2.msra.mxu0 0.0
      %287 = vmatprep.subr.mxu0 0.0
      %288 = vmatpush2.msra.mxu0 0.0
      %289 = vmatprep.subr.mxu0 0.0
      %290 = vmatpush2.msra.mxu0 0.0
      %291 = vmatprep.subr.mxu0 0.0
      %292 = vmatpush2.msra.mxu0 0.0
      %293 = vmatprep.mubr.f32.mxu0 0.0
      %294 = vmatmul.mubr.f32.gmra.mxu0 %v222
      %v295 = vpop.f32.mrf.mxu0
      %v296 = vadd.f32 %v216, %v295
      %v297 = vpop.f32.mrf.mxu0
      %v298 = vadd.f32 %v216, %v297
      %299 = vdwg.mxu0
      %v300 = vmul.f32 %v296, 0.5
      %v301 = vmul.f32 %v298, 0.5
      %v302 = vtanh.pop %v300
      %v303 = vtanh.pop %v301
      %v304 = vmul.f32 %v302, 0.5
      %v305 = vmul.f32 %v303, 0.5
      %v306 = vadd.f32 %v304, 0.5
      %v307 = vadd.f32 %v305, 0.5
      %308 = vst [vmem:[%s208] sm:$0xff] %v306
      %309 = vst [vmem:[%s208 + $0x8] sm:$0xff] %v307
      %s310 = smul.u32 2, %s19
      %p311 = scmp.lt.s32.totalorder %s18, 1
      %s312 = scalar_select %p311, %s18, 1
      %p313 = scmp.lt.s32.totalorder %s310, 1
      %s314 = scalar_select %p313, %s310, 1
      %s315 = smul.addr %s312, 2
      %s316 = sadd.s32 %s314, %s315
      %s317 = smul.addr %s316, 8
      %s318 = scalar_lea.vmem %s3, %s317
      // Predicated region
      $region33: #{guidance_map.1} parent=31 // pred_check
        %p319 = pneg %p116
      $region34: #{guidance_map.1} parent=31 // pred_check_branch
        %321 = sbr.rel (%p319) target = $region36
      $region35: #{guidance_map.1} parent=31 // pred_region
        %s322 = smul.u32 2, %s19
      $region36: #{guidance_map.1} parent=31 // pred_fallthru
        _
    $region32: #{guidance_map.1} parent=5 // pred_fallthru
      _
    %p323 = scmp.le.s32.totalorder 2, %s9
    // Predicated region
    $region37: #{guidance_map.1} parent=5 // pred_check
      %p324 = pneg %p323
    $region38: #{guidance_map.1} parent=5 // pred_check_branch
      %326 = sbr.rel (%p324) target = $region40
    $region39: #{guidance_map.1} parent=5 // pred_region
      %s327 = ssub.s32 %s9, 2
      // Predicated region
      $region41: #{guidance_map.1} parent=39 // pred_check
        %p328 = pneg %p122
      $region42: #{guidance_map.1} parent=39 // pred_check_branch
        %330 = sbr.rel (%p328) target = $region44
      $region43: #{guidance_map.1} parent=39 // pred_region
        %s331 = smul.u32 2, %s21
        %p332 = scmp.lt.s32.totalorder %s20, 1
        %s333 = scalar_select %p332, %s20, 1
        %p334 = scmp.lt.s32.totalorder %s331, 1
        %s335 = scalar_select %p334, %s331, 1
        %s336 = smul.addr %s333, 2
        %s337 = sadd.s32 %s335, %s336
        %s338 = smul.addr %s337, 8
        %s339 = scalar_lea.vmem %s3, %s338
      $region44: #{guidance_map.1} parent=39 // pred_fallthru
        _
    $region40: #{guidance_map.1} parent=5 // pred_fallthru
      _
  $region6: #{guidance_map.1} parent=0 // loop_footer
    %s13 = sadd.s32 1, %s9
  $region7: #{guidance_map.1} parent=0 // loop_footer_branch
    %8 = sbr.rel target = $region3
  $region8: #{guidance_map.1} parent=0 // loop_exit
    _

</llo_original>
